<compile_context>
chip_gen: v5e
topology: v5e:2x2
jax: 0.10.0
libtpu: 0.0.40
codegen_flags: <defaults>
</compile_context>

<pallas_src>
import functools
import math

import jax
import jax.numpy as jnp
from jax import lax
from jax.experimental import pallas as pl
from jax.experimental.pallas import tpu as pltpu


# ----------------------------------------------------------------------------
# In-kernel counter-based PRNG (add / xor / rotate only -> portable lowering).
# ----------------------------------------------------------------------------
_TF_ROT = (13, 15, 26, 6, 17, 29, 16, 24)
_TF_ROUNDS = 13           # Crush-resistant minimum for Threefry-2x32
_TF_PARITY = 0x1BD11BDA


def _threefry2x32(c0, c1, k0, k1):
    """Reduced-round Threefry-2x32.  Only add/xor/shift/or on uint32, so it
    lowers both under Mosaic (VPU) and in interpret mode."""
    k2 = k0 ^ k1 ^ jnp.uint32(_TF_PARITY)
    ks = (k0, k1, k2)
    x0 = c0 + k0
    x1 = c1 + k1
    for r in range(_TF_ROUNDS):
        rot = _TF_ROT[r % 8]
        x0 = x0 + x1
        x1 = (x1 << rot) | (x1 >> (32 - rot))
        x1 = x1 ^ x0
        if (r + 1) % 4 == 0:
            s = (r + 1) // 4
            x0 = x0 + ks[s % 3]
            x1 = x1 + ks[(s + 1) % 3] + jnp.uint32(s)
    return x0, x1


def _keep_threshold_24(p):
    """keep iff N(0,1) > p  <=>  U > Phi(p); return the 24-bit int threshold."""
    phi = 0.5 * (1.0 + math.erf(p / math.sqrt(2.0)))
    return int(phi * (1 << 24))


# ----------------------------------------------------------------------------
# Kernel: one batch tile of the full network, entirely VMEM-resident.
# ----------------------------------------------------------------------------
def _mlp_kernel(seed_ref, x_ref, w1_ref, b1_ref, w2_ref, b2_ref, w3_ref, b3_ref,
                o_ref, *, p1, p2, training):
    tile_rows = x_ref.shape[0]
    h1_cols = w1_ref.shape[1]
    h2_cols = w2_ref.shape[1]

    do1 = bool(training) and 0.0 < p1 < 1.0
    do2 = bool(training) and 0.0 < p2 < 1.0

    bits1 = bits2 = None
    if do1 or do2:
        # Counters are (global_row, col) pairs -> masks are deterministic and
        # independent of tiling / which core runs the tile.  One Threefry call
        # yields two 32-bit words per position: word0 -> layer-1 mask,
        # word1 -> layer-2 mask.  No integer multiplies anywhere.
        cols = max(h1_cols, h2_cols)
        row0 = pl.program_id(0) * tile_rows
        r_idx = lax.broadcasted_iota(jnp.int32, (tile_rows, cols), 0)
        c_idx = lax.broadcasted_iota(jnp.int32, (tile_rows, cols), 1)
        c0 = (row0 + r_idx).astype(jnp.uint32)
        c1 = c_idx.astype(jnp.uint32)
        key0 = seed_ref[0].astype(jnp.uint32)          # seed feeds the key only
        key1 = jnp.uint32(0x5851F42D)
        w0, w1b = _threefry2x32(c0, c1, key0, key1)
        mask24 = jnp.uint32(0x00FFFFFF)
        bits1 = (w0 & mask24).astype(jnp.int32)[:, :h1_cols]
        bits2 = (w1b & mask24).astype(jnp.int32)[:, :h2_cols]

    def dropout(h, p, bits):
        # Reference semantics: keep iff N(0,1) > p, scale kept by 1/(1-p).
        if (not training) or p == 0.0:
            return h
        if p >= 1.0:
            return jnp.zeros_like(h)
        thr = jnp.int32(_keep_threshold_24(p))
        return jnp.where(bits > thr,
                         h * jnp.float32(1.0 / (1.0 - p)),
                         jnp.float32(0.0))

    # bf16 MXU operands, f32 accumulation + VPU math (bias / ReLU / dropout).
    x = x_ref[...].astype(jnp.bfloat16)                # cast hidden under matmul

    h1 = jnp.dot(x, w1_ref[...], preferred_element_type=jnp.float32) + b1_ref[...]
    h1 = jnp.maximum(h1, 0.0)
    h1 = dropout(h1, p1, bits1)

    h2 = jnp.dot(h1.astype(jnp.bfloat16), w2_ref[...],
                 preferred_element_type=jnp.float32) + b2_ref[...]
    h2 = jnp.maximum(h2, 0.0)
    h2 = dropout(h2, p2, bits2)

    h3 = jnp.dot(h2.astype(jnp.bfloat16), w3_ref[...],
                 preferred_element_type=jnp.float32) + b3_ref[...]
    o_ref[...] = jnp.maximum(h3, 0.0).astype(o_ref.dtype)


# ----------------------------------------------------------------------------
# Wrapper
# ----------------------------------------------------------------------------
def _round_up(n, m):
    return ((n + m - 1) // m) * m


def _pad2d(a, rows, cols):
    r, c = a.shape
    if (r, c) == (rows, cols):
        return a
    return jnp.pad(a, ((0, rows - r), (0, cols - c)))


def net_forward(x, params, seed, *, p1, p2, training=True, tile_m=None):
    """Flatten input to [rows, ip_cnt], run the Pallas MLP, return [rows, op_cnt]."""
    assert 0.0 <= p1 <= 1.0 and 0.0 <= p2 <= 1.0
    w1, b1 = params["w1"], params["b1"]
    w2, b2 = params["w2"], params["b2"]
    w3, b3 = params["w3"], params["b3"]
    ip_cnt, hid1 = w1.shape
    hid2 = w2.shape[1]
    op_cnt = w3.shape[1]

    # Lane-pad every feature dim to a multiple of 128 (zero padding is exact).
    # Weights/biases are tiny, so their one-off pad + bf16 cast is negligible.
    ip_p, h1_p, h2_p, op_p = (_round_up(d, 128) for d in (ip_cnt, hid1, hid2, op_cnt))

    xf = x.reshape(-1, ip_cnt)
    rows = xf.shape[0]
    if ip_p != ip_cnt:                       # no-op when ip_cnt % 128 == 0
        xf = jnp.pad(xf, ((0, 0), (0, ip_p - ip_cnt)))
    # NOTE: x keeps its native dtype (kernel casts to bf16) and is never
    # batch-padded; a partial last tile is handled by Pallas (OOB rows dropped).

    w1_p = _pad2d(w1, ip_p, h1_p).astype(jnp.bfloat16)
    w2_p = _pad2d(w2, h1_p, h2_p).astype(jnp.bfloat16)
    w3_p = _pad2d(w3, h2_p, op_p).astype(jnp.bfloat16)
    b1_p = _pad2d(b1.reshape(1, -1), 1, h1_p).astype(jnp.float32)
    b2_p = _pad2d(b2.reshape(1, -1), 1, h2_p).astype(jnp.float32)
    b3_p = _pad2d(b3.reshape(1, -1), 1, op_p).astype(jnp.float32)

    # Batch tile: as large as VMEM comfortably allows (per-step overhead
    # ~0.35 us), but always >=2 tiles when the batch permits so the "parallel"
    # axis shards across both TensorCores on megacore parts.
    if tile_m is None:
        if rows <= 8:
            tile_m = rows                    # single full-extent block
        elif rows <= 2048:
            tile_m = _round_up((rows + 1) // 2, 8)
        else:
            tile_m = 1024
        # Keep double-buffered f32 x/out tiles well under the default scoped
        # VMEM (16 MiB on v5e, 32 MiB on v6e/v7x) -> no vmem_limit_bytes needed.
        db_bytes_per_row = 2 * 4 * (ip_p + op_p)
        cap = max(8, ((10 * (1 << 20)) // db_bytes_per_row) // 8 * 8)
        tile_m = min(tile_m, cap)
    grid_m = pl.cdiv(rows, tile_m)

    seed_arr = jnp.asarray([seed], dtype=jnp.int32)    # SMEM scalar prefetch

    kernel = functools.partial(_mlp_kernel, p1=float(p1), p2=float(p2),
                               training=bool(training))

    # index_maps receive (grid_i, seed_ref) because of num_scalar_prefetch=1.
    const = lambda i, seed_ref: (0, 0)      # weights / biases: VMEM-resident
    tiled = lambda i, seed_ref: (i, 0)      # x / out: tiled over the batch
    # (pipeline_mode=pl.Buffered(1) on the constant-index weight blocks would
    #  save ~160 KB of VMEM, omitted for portability across jax versions.)

    out = pl.pallas_call(
        kernel,
        out_shape=jax.ShapeDtypeStruct((rows, op_p), jnp.float32),
        grid_spec=pltpu.PrefetchScalarGridSpec(
            num_scalar_prefetch=1,
            grid=(grid_m,),
            in_specs=[
                pl.BlockSpec((tile_m, ip_p), tiled),
                pl.BlockSpec((ip_p, h1_p), const),
                pl.BlockSpec((1, h1_p), const),
                pl.BlockSpec((h1_p, h2_p), const),
                pl.BlockSpec((1, h2_p), const),
                pl.BlockSpec((h2_p, op_p), const),
                pl.BlockSpec((1, op_p), const),
            ],
            out_specs=pl.BlockSpec((tile_m, op_p), tiled),
        ),
        compiler_params=pltpu.CompilerParams(
            dimension_semantics=("parallel",)),
    )(seed_arr, xf, w1_p, b1_p, w2_p, b2_p, w3_p, b3_p)

    # Only the lane padding (op_cnt -> op_p) is sliced off; no batch slice.
    return out[:, :op_cnt]


# ----------------------------------------------------------------------------
# Demo / self-check
# ----------------------------------------------------------------------------
def init_params(key, ip_cnt, hid1_cnt, hid2_cnt, op_cnt):
    """Deterministic synthetic parameters.  Weights stored as [in, out]."""
    k1, k2, k3, k4, k5, k6 = jax.random.split(key, 6)
    s = 0.05
    return {
        "w1": s * jax.random.normal(k1, (ip_cnt, hid1_cnt), jnp.float32),
        "b1": s * jax.random.normal(k2, (1, hid1_cnt), jnp.float32),
        "w2": s * jax.random.normal(k3, (hid1_cnt, hid2_cnt), jnp.float32),
        "b2": s * jax.random.normal(k4, (1, hid2_cnt), jnp.float32),
        "w3": s * jax.random.normal(k5, (hid2_cnt, op_cnt), jnp.float32),
        "b3": s * jax.random.normal(k6, (1, op_cnt), jnp.float32),
    }


def _reference_forward_eval(x, params):
    """Pure-JAX eval-mode reference with kernel-matching numerics
    (bf16 matmul operands, f32 accumulation / elementwise)."""
    ip_cnt = params["w1"].shape[0]
    h = x.reshape(-1, ip_cnt).astype(jnp.float32)

    def lin_relu(h, w, b):
        y = jnp.dot(h.astype(jnp.bfloat16), w.astype(jnp.bfloat16),
                    preferred_element_type=jnp.float32) + b.reshape(1, -1)
        return jnp.maximum(y, 0.0)

    h1 = lin_relu(h, params["w1"], params["b1"])
    h2 = lin_relu(h1, params["w2"], params["b2"])
    return lin_relu(h2, params["w3"], params["b3"])


if __name__ == "__main__":
    ip_cnt, hid1_cnt, hid2_cnt, op_cnt = 256, 128, 64, 32
    p1, p2 = 0.2, 0.5

    key = jax.random.PRNGKey(0)
    k_x, k_p = jax.random.split(key, 2)

    # NCHW-style input; reshape(-1, ip_cnt) -> [8, 256].
    x = jax.random.normal(k_x, (2, 4, 16, 16), jnp.float32)
    batch = x.size // ip_cnt

    params = init_params(k_p, ip_cnt, hid1_cnt, hid2_cnt, op_cnt)

    # --- Eval mode: check against the pure-JAX reference --------------------
    out_eval = jax.block_until_ready(
        net_forward(x, params, seed=0, p1=p1, p2=p2, training=False))
    ref_eval = _reference_forward_eval(x, params)
    assert out_eval.shape == (batch, op_cnt)
    assert jnp.allclose(out_eval, ref_eval, atol=5e-3, rtol=5e-3), \
        "eval-mode mismatch vs reference"

    # --- Training mode: in-kernel PRNG dropout -------------------------------
    out_tr1 = jax.block_until_ready(
        net_forward(x, params, seed=1234, p1=p1, p2=p2, training=True))
    out_tr2 = jax.block_until_ready(
        net_forward(x, params, seed=1234, p1=p1, p2=p2, training=True))
    out_tr3 = jax.block_until_ready(
        net_forward(x, params, seed=4321, p1=p1, p2=p2, training=True))
    assert out_tr1.shape == (batch, op_cnt)
    assert bool(jnp.all(jnp.isfinite(out_tr1)))
    assert bool(jnp.all(out_tr1 >= 0.0))                 # ReLU output
    assert bool(jnp.any(out_tr1 > 0.0))                  # not degenerate
    assert jnp.array_equal(out_tr1, out_tr2), "same seed must give same mask"
    assert not jnp.array_equal(out_tr1, out_tr3), "seed must change the mask"
    assert not jnp.allclose(out_tr1, out_eval), "dropout had no effect"

    print("KERNEL_OK")
</pallas_src>

<mosaic_0001>
module attributes {stable_mosaic.version = 11 : i64} {
  func.func @_mlp_kernel(%arg0: i32, %arg1: memref<1xi32, #tpu.memory_space<smem>>, %arg2: memref<8x256xf32, #tpu.memory_space<vmem>>, %arg3: memref<256x128xbf16, #tpu.memory_space<vmem>>, %arg4: memref<1x128xf32, #tpu.memory_space<vmem>>, %arg5: memref<128x128xbf16, #tpu.memory_space<vmem>>, %arg6: memref<1x128xf32, #tpu.memory_space<vmem>>, %arg7: memref<128x128xbf16, #tpu.memory_space<vmem>>, %arg8: memref<1x128xf32, #tpu.memory_space<vmem>>, %arg9: memref<8x128xf32, #tpu.memory_space<vmem>>) attributes {dimension_semantics = [#tpu.dimension_semantics<parallel>], iteration_bounds = array<i64: 1>, scalar_prefetch = 1 : i64, scratch_operands = 0 : i64, tpu.core_type = #tpu.core_type<tc>, window_params = [{transform_indices = @transform_0, window_bounds = array<i64: 8, 256>}, {pipeline_mode = #tpu.pipeline_mode<synchronous>, transform_indices = @transform_1, window_bounds = array<i64: 256, 128>}, {pipeline_mode = #tpu.pipeline_mode<synchronous>, transform_indices = @transform_2, window_bounds = array<i64: 1, 128>}, {pipeline_mode = #tpu.pipeline_mode<synchronous>, transform_indices = @transform_3, window_bounds = array<i64: 128, 128>}, {pipeline_mode = #tpu.pipeline_mode<synchronous>, transform_indices = @transform_4, window_bounds = array<i64: 1, 128>}, {pipeline_mode = #tpu.pipeline_mode<synchronous>, transform_indices = @transform_5, window_bounds = array<i64: 128, 128>}, {pipeline_mode = #tpu.pipeline_mode<synchronous>, transform_indices = @transform_6, window_bounds = array<i64: 1, 128>}, {transform_indices = @transform_7, window_bounds = array<i64: 8, 128>}]} {
    %c0 = arith.constant 0 : index
    %c0_0 = arith.constant 0 : index
    %0 = vector.load %arg2[%c0, %c0_0] : memref<8x256xf32, #tpu.memory_space<vmem>>, vector<8x256xf32>
    %1 = arith.truncf %0 : vector<8x256xf32> to vector<8x256xbf16>
    %c0_1 = arith.constant 0 : index
    %c0_2 = arith.constant 0 : index
    %2 = vector.load %arg3[%c0_1, %c0_2] : memref<256x128xbf16, #tpu.memory_space<vmem>>, vector<256x128xbf16>
    %cst = arith.constant dense<0.000000e+00> : vector<8x128xf32>
    %3 = tpu.matmul %1, %2, %cst {dimension_numbers = #tpu.dot_dimension_numbers<[1], [0], [0], [1], [0, 0, 1, 1], [], []>} : vector<8x256xbf16>, vector<256x128xbf16>, vector<8x128xf32> -> vector<8x128xf32>
    %c0_3 = arith.constant 0 : index
    %c0_4 = arith.constant 0 : index
    %4 = vector.load %arg4[%c0_3, %c0_4] : memref<1x128xf32, #tpu.memory_space<vmem>>, vector<1x128xf32>
    %5 = vector.broadcast %4 : vector<1x128xf32> to vector<8x128xf32>
    %6 = arith.addf %3, %5 : vector<8x128xf32>
    %cst_5 = arith.constant 0.000000e+00 : f32
    %7 = vector.broadcast %cst_5 : f32 to vector<8x128xf32>
    %8 = arith.maximumf %6, %7 : vector<8x128xf32>
    %9 = arith.truncf %8 : vector<8x128xf32> to vector<8x128xbf16>
    %c0_6 = arith.constant 0 : index
    %c0_7 = arith.constant 0 : index
    %10 = vector.load %arg5[%c0_6, %c0_7] : memref<128x128xbf16, #tpu.memory_space<vmem>>, vector<128x128xbf16>
    %cst_8 = arith.constant dense<0.000000e+00> : vector<8x128xf32>
    %11 = tpu.matmul %9, %10, %cst_8 {dimension_numbers = #tpu.dot_dimension_numbers<[1], [0], [0], [1], [0, 0, 1, 1], [], []>} : vector<8x128xbf16>, vector<128x128xbf16>, vector<8x128xf32> -> vector<8x128xf32>
    %c0_9 = arith.constant 0 : index
    %c0_10 = arith.constant 0 : index
    %12 = vector.load %arg6[%c0_9, %c0_10] : memref<1x128xf32, #tpu.memory_space<vmem>>, vector<1x128xf32>
    %13 = vector.broadcast %12 : vector<1x128xf32> to vector<8x128xf32>
    %14 = arith.addf %11, %13 : vector<8x128xf32>
    %cst_11 = arith.constant 0.000000e+00 : f32
    %15 = vector.broadcast %cst_11 : f32 to vector<8x128xf32>
    %16 = arith.maximumf %14, %15 : vector<8x128xf32>
    %17 = arith.truncf %16 : vector<8x128xf32> to vector<8x128xbf16>
    %c0_12 = arith.constant 0 : index
    %c0_13 = arith.constant 0 : index
    %18 = vector.load %arg7[%c0_12, %c0_13] : memref<128x128xbf16, #tpu.memory_space<vmem>>, vector<128x128xbf16>
    %cst_14 = arith.constant dense<0.000000e+00> : vector<8x128xf32>
    %19 = tpu.matmul %17, %18, %cst_14 {dimension_numbers = #tpu.dot_dimension_numbers<[1], [0], [0], [1], [0, 0, 1, 1], [], []>} : vector<8x128xbf16>, vector<128x128xbf16>, vector<8x128xf32> -> vector<8x128xf32>
    %c0_15 = arith.constant 0 : index
    %c0_16 = arith.constant 0 : index
    %20 = vector.load %arg8[%c0_15, %c0_16] : memref<1x128xf32, #tpu.memory_space<vmem>>, vector<1x128xf32>
    %21 = vector.broadcast %20 : vector<1x128xf32> to vector<8x128xf32>
    %22 = arith.addf %19, %21 : vector<8x128xf32>
    %cst_17 = arith.constant 0.000000e+00 : f32
    %23 = vector.broadcast %cst_17 : f32 to vector<8x128xf32>
    %24 = arith.maximumf %22, %23 : vector<8x128xf32>
    %c0_18 = arith.constant 0 : index
    %c0_19 = arith.constant 0 : index
    %25 = vector.load %arg9[%c0_18, %c0_19] : memref<8x128xf32, #tpu.memory_space<vmem>>, vector<8x128xf32>
    tpu.vector_store %arg9[%c0_18, %c0_19], %24 {strides = array<i32>} : memref<8x128xf32, #tpu.memory_space<vmem>>, vector<8x128xf32>,
    return
  }
  func.func @transform_0(%arg0: i32, %arg1: memref<1xi32, #tpu.memory_space<smem>>) -> (i32, i32) {
    %c0_i32 = arith.constant 0 : i32
    %c0_i32_0 = arith.constant 0 : i32
    return %arg0, %c0_i32 : i32, i32
  }
  func.func @transform_1(%arg0: i32, %arg1: memref<1xi32, #tpu.memory_space<smem>>) -> (i32, i32) {
    %c0_i32 = arith.constant 0 : i32
    %c0_i32_0 = arith.constant 0 : i32
    %c0_i32_1 = arith.constant 0 : i32
    return %c0_i32, %c0_i32_0 : i32, i32
  }
  func.func @transform_2(%arg0: i32, %arg1: memref<1xi32, #tpu.memory_space<smem>>) -> (i32, i32) {
    %c0_i32 = arith.constant 0 : i32
    %c0_i32_0 = arith.constant 0 : i32
    %c0_i32_1 = arith.constant 0 : i32
    return %c0_i32, %c0_i32_0 : i32, i32
  }
  func.func @transform_3(%arg0: i32, %arg1: memref<1xi32, #tpu.memory_space<smem>>) -> (i32, i32) {
    %c0_i32 = arith.constant 0 : i32
    %c0_i32_0 = arith.constant 0 : i32
    %c0_i32_1 = arith.constant 0 : i32
    return %c0_i32, %c0_i32_0 : i32, i32
  }
  func.func @transform_4(%arg0: i32, %arg1: memref<1xi32, #tpu.memory_space<smem>>) -> (i32, i32) {
    %c0_i32 = arith.constant 0 : i32
    %c0_i32_0 = arith.constant 0 : i32
    %c0_i32_1 = arith.constant 0 : i32
    return %c0_i32, %c0_i32_0 : i32, i32
  }
  func.func @transform_5(%arg0: i32, %arg1: memref<1xi32, #tpu.memory_space<smem>>) -> (i32, i32) {
    %c0_i32 = arith.constant 0 : i32
    %c0_i32_0 = arith.constant 0 : i32
    %c0_i32_1 = arith.constant 0 : i32
    return %c0_i32, %c0_i32_0 : i32, i32
  }
  func.func @transform_6(%arg0: i32, %arg1: memref<1xi32, #tpu.memory_space<smem>>) -> (i32, i32) {
    %c0_i32 = arith.constant 0 : i32
    %c0_i32_0 = arith.constant 0 : i32
    %c0_i32_1 = arith.constant 0 : i32
    return %c0_i32, %c0_i32_0 : i32, i32
  }
  func.func @transform_7(%arg0: i32, %arg1: memref<1xi32, #tpu.memory_space<smem>>) -> (i32, i32) {
    %c0_i32 = arith.constant 0 : i32
    %c0_i32_0 = arith.constant 0 : i32
    return %arg0, %c0_i32 : i32, i32
  }
}

</mosaic_0001>

<llo_original>
// kernel: tpu_custom_call.1
$region0: #{tpu_custom_call.1}
  #allocation0 [shape = 'u32[]', space=smem, size = 0x4, offset = 0x4, fixed_abs, tag = 'smem constant byte address 0x4 - core index']
  #allocation1 [shape = 'u32[72,128]{1,0:T(1,128)}', space=vmem, size = 0x9000, scoped, tag = 'internal scratch']
  #allocation2 [shape = 's32[1]{0}', space=sflag, size = 0x4, scoped, tag = 'scoped memory for tpu_custom_call.1']
  #allocation3 [shape = 's32[1]{0:T(128)S(6)}', space=smem, size = 0x200, scoped, tag = 'prefetched SMEM operand 0']
  %s0 = inlined_call_operand.<no memory space> [shape: s32[1], index: 0, kind: input, shape index: {}]
  %s1 = inlined_call_operand.hbm [shape: f32[8,256], index: 1, kind: input, shape index: {}]
  %s2 = inlined_call_operand.hbm [shape: bf16[256,128], index: 2, kind: input, shape index: {}]
  %s3 = inlined_call_operand.vmem [shape: f32[1,128], index: 3, kind: input, shape index: {}]
  %s4 = inlined_call_operand.hbm [shape: bf16[128,128], index: 4, kind: input, shape index: {}]
  %s5 = inlined_call_operand.vmem [shape: f32[1,128], index: 5, kind: input, shape index: {}]
  %s6 = inlined_call_operand.hbm [shape: bf16[128,128], index: 6, kind: input, shape index: {}]
  %s7 = inlined_call_operand.vmem [shape: f32[1,128], index: 7, kind: input, shape index: {}]
  %s8 = inlined_call_operand.hbm [shape: f32[8,128], index: 8, kind: output, shape index: {}]
  %s9 = sld [smem:[#allocation0]]
  $region54: #{tpu_custom_call.1} parent=0
    _
  %s11 = ssub.s32 1, %s9
  %s12 = scalar_select 0, %s11, %s9
  %13 = sst [smem:[#allocation3]] %s0
  $region1: #{tpu_custom_call.1} parent=0
    #allocation4 [shape = 'u8[8192]{0}', space=vmem, size = 0x2000, scoped, tag = 'input window, operand 1, single buffered']
    #allocation5 [shape = 's32[1]{0}', space=sflag, size = 0x4, scoped, tag = 'scoped memory for tpu_custom_call.1']
    #allocation6 [shape = 's32[1]{0}', space=sflag, size = 0x4, scoped, tag = 'scoped memory for tpu_custom_call.1']
    #allocation7 [shape = 'u8[65536]{0}', space=vmem, size = 0x10000, scoped, tag = 'input window, operand 2, single buffered']
    #allocation8 [shape = 's32[1]{0}', space=sflag, size = 0x4, scoped, tag = 'scoped memory for tpu_custom_call.1']
    #allocation9 [shape = 'u8[32768]{0}', space=vmem, size = 0x8000, scoped, tag = 'input window, operand 4, single buffered']
    #allocation10 [shape = 'u8[32768]{0}', space=vmem, size = 0x8000, scoped, tag = 'input window, operand 6, single buffered']
    #allocation11 [shape = 's32[1]{0}', space=sflag, size = 0x4, scoped, tag = 'scoped memory for tpu_custom_call.1']
    #allocation12 [shape = 'u8[4096]{0}', space=vmem, size = 0x1000, scoped, tag = 'output window, operand 0, single buffered']
    %14 = vsyncpa [#allocation5], 0
    %15 = vsyncpa [#allocation8], 0
    %16 = vsyncpa [#allocation11], 0
    %17 = vsyncpa [#allocation6], 0
    // Predicated region
    $region2: #{tpu_custom_call.1} parent=1 // pred_check
      _
    $region3: #{tpu_custom_call.1} parent=1 // pred_check_branch
      %19 = sbr.rel (0) target = $region5
    $region4: #{tpu_custom_call.1} parent=1 // pred_region
      %21 = vsyncadd [#allocation5], 0
      %s23 = sshll.u32 %s1, 4
      %s24 = int_to_ptr.hbm [resolvable:$true] %s23
      %s25 = sshll.u32 [#allocation4], 4
      %s26 = int_to_ptr.vmem [resolvable:$true] %s25
      %28 = dma.hbm_to_vmem [thread:$0]  %s24, 256, %s26, [#allocation5]
    $region5: #{tpu_custom_call.1} parent=1 // pred_fallthru
      _
    // Predicated region
    $region6: #{tpu_custom_call.1} parent=1 // pred_check
      _
    $region7: #{tpu_custom_call.1} parent=1 // pred_check_branch
      %30 = sbr.rel (0) target = $region9
    $region8: #{tpu_custom_call.1} parent=1 // pred_region
      %32 = vsyncadd [#allocation8], 0
      %s33 = sshll.u32 %s2, 4
      %s34 = int_to_ptr.hbm [resolvable:$true] %s33
      %s35 = sshll.u32 [#allocation7], 4
      %s36 = int_to_ptr.vmem [resolvable:$true] %s35
      %41 = dma.hbm_to_vmem [thread:$0]  %s34, 2048, %s36, [#allocation8], 64, 64, 4
    $region9: #{tpu_custom_call.1} parent=1 // pred_fallthru
      _
    // Predicated region
    $region10: #{tpu_custom_call.1} parent=1 // pred_check
      _
    $region11: #{tpu_custom_call.1} parent=1 // pred_check_branch
      %43 = sbr.rel (0) target = $region13
    $region12: #{tpu_custom_call.1} parent=1 // pred_region
      _
    $region13: #{tpu_custom_call.1} parent=1 // pred_fallthru
      _
    // Predicated region
    $region14: #{tpu_custom_call.1} parent=1 // pred_check
      _
    $region15: #{tpu_custom_call.1} parent=1 // pred_check_branch
      %45 = sbr.rel (0) target = $region17
    $region16: #{tpu_custom_call.1} parent=1 // pred_region
      %47 = vsyncadd [#allocation8], 0
      %s48 = sshll.u32 %s4, 4
      %s49 = int_to_ptr.hbm [resolvable:$true] %s48
      %s50 = sshll.u32 [#allocation9], 4
      %s51 = int_to_ptr.vmem [resolvable:$true] %s50
      %56 = dma.hbm_to_vmem [thread:$0]  %s49, 1024, %s51, [#allocation8], 64, 64, 4
    $region17: #{tpu_custom_call.1} parent=1 // pred_fallthru
      _
    // Predicated region
    $region18: #{tpu_custom_call.1} parent=1 // pred_check
      _
    $region19: #{tpu_custom_call.1} parent=1 // pred_check_branch
      %58 = sbr.rel (0) target = $region21
    $region20: #{tpu_custom_call.1} parent=1 // pred_region
      _
    $region21: #{tpu_custom_call.1} parent=1 // pred_fallthru
      _
    // Predicated region
    $region22: #{tpu_custom_call.1} parent=1 // pred_check
      _
    $region23: #{tpu_custom_call.1} parent=1 // pred_check_branch
      %60 = sbr.rel (0) target = $region25
    $region24: #{tpu_custom_call.1} parent=1 // pred_region
      %62 = vsyncadd [#allocation11], 0
      %s63 = sshll.u32 %s6, 4
      %s64 = int_to_ptr.hbm [resolvable:$true] %s63
      %s65 = sshll.u32 [#allocation10], 4
      %s66 = int_to_ptr.vmem [resolvable:$true] %s65
      %71 = dma.hbm_to_vmem [thread:$0]  %s64, 1024, %s66, [#allocation11], 64, 64, 4
    $region25: #{tpu_custom_call.1} parent=1 // pred_fallthru
      _
    // Predicated region
    $region26: #{tpu_custom_call.1} parent=1 // pred_check
      _
    $region27: #{tpu_custom_call.1} parent=1 // pred_check_branch
      %73 = sbr.rel (0) target = $region29
    $region28: #{tpu_custom_call.1} parent=1 // pred_region
      _
    $region29: #{tpu_custom_call.1} parent=1 // pred_fallthru
      _
    // Predicated region
    $region30: #{tpu_custom_call.1} parent=1 // pred_check
      _
    $region31: #{tpu_custom_call.1} parent=1 // pred_check_branch
      %75 = sbr.rel (0) target = $region33
    $region32: #{tpu_custom_call.1} parent=1 // pred_region
      %77 = dma.done [#allocation5], 256
    $region33: #{tpu_custom_call.1} parent=1 // pred_fallthru
      _
    // Predicated region
    $region34: #{tpu_custom_call.1} parent=1 // pred_check
      _
    $region35: #{tpu_custom_call.1} parent=1 // pred_check_branch
      %79 = sbr.rel (0) target = $region37
    $region36: #{tpu_custom_call.1} parent=1 // pred_region
      %81 = dma.done [#allocation8], 2048
    $region37: #{tpu_custom_call.1} parent=1 // pred_fallthru
      _
    // Predicated region
    $region38: #{tpu_custom_call.1} parent=1 // pred_check
      _
    $region39: #{tpu_custom_call.1} parent=1 // pred_check_branch
      %83 = sbr.rel (0) target = $region41
    $region40: #{tpu_custom_call.1} parent=1 // pred_region
      %85 = dma.done [#allocation8], 1024
    $region41: #{tpu_custom_call.1} parent=1 // pred_fallthru
      _
    // Predicated region
    $region42: #{tpu_custom_call.1} parent=1 // pred_check
      _
    $region43: #{tpu_custom_call.1} parent=1 // pred_check_branch
      %87 = sbr.rel (0) target = $region45
    $region44: #{tpu_custom_call.1} parent=1 // pred_region
      %89 = dma.done [#allocation11], 1024
    $region45: #{tpu_custom_call.1} parent=1 // pred_fallthru
      _
    %v90 = vld [vmem:[#allocation4] sm:$0xff]
    %v91 = vld [vmem:[#allocation4 + $0x8] sm:$0xff]
    %v92 = vpack.c.bf16 %v90, %v90
    %v93 = vpack.c.bf16 %v91, %v91
    %v94 = vld [vmem:[#allocation7] sm:$0xf]
    %v95 = vld [vmem:[#allocation7 + $0x4] sm:$0xf]
    %v96 = vld [vmem:[#allocation7 + $0x8] sm:$0xf]
    %v97 = vld [vmem:[#allocation7 + $0xc] sm:$0xf]
    %v98 = vld [vmem:[#allocation7 + $0x10] sm:$0xf]
    %v99 = vld [vmem:[#allocation7 + $0x14] sm:$0xf]
    %v100 = vld [vmem:[#allocation7 + $0x18] sm:$0xf]
    %v101 = vld [vmem:[#allocation7 + $0x1c] sm:$0xf]
    %v102 = vld [vmem:[#allocation7 + $0x20] sm:$0xf]
    %v103 = vld [vmem:[#allocation7 + $0x24] sm:$0xf]
    %v104 = vld [vmem:[#allocation7 + $0x28] sm:$0xf]
    %v105 = vld [vmem:[#allocation7 + $0x2c] sm:$0xf]
    %v106 = vld [vmem:[#allocation7 + $0x30] sm:$0xf]
    %v107 = vld [vmem:[#allocation7 + $0x34] sm:$0xf]
    %v108 = vld [vmem:[#allocation7 + $0x38] sm:$0xf]
    %v109 = vld [vmem:[#allocation7 + $0x3c] sm:$0xf]
    %v110 = vld [vmem:[#allocation7 + $0x40] sm:$0xf]
    %v111 = vld [vmem:[#allocation7 + $0x44] sm:$0xf]
    %v112 = vld [vmem:[#allocation7 + $0x48] sm:$0xf]
    %v113 = vld [vmem:[#allocation7 + $0x4c] sm:$0xf]
    %v114 = vld [vmem:[#allocation7 + $0x50] sm:$0xf]
    %v115 = vld [vmem:[#allocation7 + $0x54] sm:$0xf]
    %v116 = vld [vmem:[#allocation7 + $0x58] sm:$0xf]
    %v117 = vld [vmem:[#allocation7 + $0x5c] sm:$0xf]
    %v118 = vld [vmem:[#allocation7 + $0x60] sm:$0xf]
    %v119 = vld [vmem:[#allocation7 + $0x64] sm:$0xf]
    %v120 = vld [vmem:[#allocation7 + $0x68] sm:$0xf]
    %v121 = vld [vmem:[#allocation7 + $0x6c] sm:$0xf]
    %v122 = vld [vmem:[#allocation7 + $0x70] sm:$0xf]
    %v123 = vld [vmem:[#allocation7 + $0x74] sm:$0xf]
    %v124 = vld [vmem:[#allocation7 + $0x78] sm:$0xf]
    %v125 = vld [vmem:[#allocation7 + $0x7c] sm:$0xf]
    %v126 = vld [vmem:[%s3] sm:$0x1]
    %v128 = vperm.slane %v126, 0
    %v162 = vunpack.c.l.b16 %v94
    %v163 = vunpack.c.l.b16 %v95
    %v164 = vunpack.c.l.b16 %v96
    %v165 = vunpack.c.l.b16 %v97
    %v166 = vunpack.c.l.b16 %v98
    %v167 = vunpack.c.l.b16 %v99
    %v168 = vunpack.c.l.b16 %v100
    %v169 = vunpack.c.l.b16 %v101
    %v170 = vunpack.c.l.b16 %v102
    %v171 = vunpack.c.l.b16 %v103
    %v172 = vunpack.c.l.b16 %v104
    %v173 = vunpack.c.l.b16 %v105
    %v174 = vunpack.c.l.b16 %v106
    %v175 = vunpack.c.l.b16 %v107
    %v176 = vunpack.c.l.b16 %v108
    %v177 = vunpack.c.l.b16 %v109
    %v178 = vunpack.c.l.b16 %v110
    %v179 = vunpack.c.l.b16 %v111
    %v180 = vunpack.c.l.b16 %v112
    %v181 = vunpack.c.l.b16 %v113
    %v182 = vunpack.c.l.b16 %v114
    %v183 = vunpack.c.l.b16 %v115
    %v184 = vunpack.c.l.b16 %v116
    %v185 = vunpack.c.l.b16 %v117
    %v186 = vunpack.c.l.b16 %v118
    %v187 = vunpack.c.l.b16 %v119
    %v188 = vunpack.c.l.b16 %v120
    %v189 = vunpack.c.l.b16 %v121
    %v190 = vunpack.c.l.b16 %v122
    %v191 = vunpack.c.l.b16 %v123
    %v192 = vunpack.c.l.b16 %v124
    %v193 = vunpack.c.l.b16 %v125
    %v194 = vpack.c.b16 %v163, %v162
    %v195 = vpack.c.b16 %v165, %v164
    %v196 = vpack.c.b16 %v167, %v166
    %v197 = vpack.c.b16 %v169, %v168
    %v198 = vpack.c.b16 %v171, %v170
    %v199 = vpack.c.b16 %v173, %v172
    %v200 = vpack.c.b16 %v175, %v174
    %v201 = vpack.c.b16 %v177, %v176
    %v202 = vpack.c.b16 %v179, %v178
    %v203 = vpack.c.b16 %v181, %v180
    %v204 = vpack.c.b16 %v183, %v182
    %v205 = vpack.c.b16 %v185, %v184
    %v206 = vpack.c.b16 %v187, %v186
    %v207 = vpack.c.b16 %v189, %v188
    %v208 = vpack.c.b16 %v191, %v190
    %v209 = vpack.c.b16 %v193, %v192
    %226 = vmatpush.bf16.msra.mxu0 %v201
    %227 = vmatpush.bf16.msra.mxu0 %v200
    %228 = vmatpush.bf16.msra.mxu0 %v199
    %229 = vmatpush.bf16.msra.mxu0 %v198
    %230 = vmatpush.bf16.msra.mxu0 %v197
    %231 = vmatpush.bf16.msra.mxu0 %v196
    %232 = vmatpush.bf16.msra.mxu0 %v195
    %233 = vmatpush.bf16.msra.mxu0 %v194
    %234 = vmatmul.bf16.gmra.mxu0 %v92
    %v235 = vpop.f32.mrf.mxu0
    %v236 = vadd.f32 %v128, %v235
    %v237 = vpop.f32.mrf.mxu0
    %238 = vdwg.mxu0
    %239 = vmatpush.bf16.msra.mxu0 %v209
    %240 = vmatpush.bf16.msra.mxu0 %v208
    %241 = vmatpush.bf16.msra.mxu0 %v207
    %242 = vmatpush.bf16.msra.mxu0 %v206
    %243 = vmatpush.bf16.msra.mxu0 %v205
    %244 = vmatpush.bf16.msra.mxu0 %v204
    %245 = vmatpush.bf16.msra.mxu0 %v203
    %246 = vmatpush.bf16.msra.mxu0 %v202
    %247 = vmatmul.bf16.gmra.mxu0 %v93
    %v248 = vpop.f32.mrf.mxu0
    %v249 = vadd.f32 %v236, %v248
    %v250 = vpop.f32.mrf.mxu0
    %251 = vdwg.mxu0
    %v252 = vmax.f32 %v249, 0.0
    %v253 = vpack.c.bf16 %v252, %v252
    %v254 = vld [vmem:[#allocation9] sm:$0xf]
    %v255 = vld [vmem:[#allocation9 + $0x4] sm:$0xf]
    %v256 = vld [vmem:[#allocation9 + $0x8] sm:$0xf]
    %v257 = vld [vmem:[#allocation9 + $0xc] sm:$0xf]
    %v258 = vld [vmem:[#allocation9 + $0x10] sm:$0xf]
    %v259 = vld [vmem:[#allocation9 + $0x14] sm:$0xf]
    %v260 = vld [vmem:[#allocation9 + $0x18] sm:$0xf]
    %v261 = vld [vmem:[#allocation9 + $0x1c] sm:$0xf]
    %v262 = vld [vmem:[#allocation9 + $0x20] sm:$0xf]
    %v263 = vld [vmem:[#allocation9 + $0x24] sm:$0xf]
    %v264 = vld [vmem:[#allocation9 + $0x28] sm:$0xf]
    %v265 = vld [vmem:[#allocation9 + $0x2c] sm:$0xf]
    %v266 = vld [vmem:[#allocation9 + $0x30] sm:$0xf]
    %v267 = vld [vmem:[#allocation9 + $0x34] sm:$0xf]
    %v268 = vld [vmem:[#allocation9 + $0x38] sm:$0xf]
    %v269 = vld [vmem:[#allocation9 + $0x3c] sm:$0xf]
    %v270 = vld [vmem:[%s5] sm:$0x1]
    %v272 = vperm.slane %v270, 0
    %v290 = vunpack.c.l.b16 %v254
    %v291 = vunpack.c.l.b16 %v255
    %v292 = vunpack.c.l.b16 %v256
    %v293 = vunpack.c.l.b16 %v257
    %v294 = vunpack.c.l.b16 %v258
    %v295 = vunpack.c.l.b16 %v259
    %v296 = vunpack.c.l.b16 %v260
    %v297 = vunpack.c.l.b16 %v261
    %v298 = vunpack.c.l.b16 %v262
    %v299 = vunpack.c.l.b16 %v263
    %v300 = vunpack.c.l.b16 %v264
    %v301 = vunpack.c.l.b16 %v265
    %v302 = vunpack.c.l.b16 %v266
    %v303 = vunpack.c.l.b16 %v267
    %v304 = vunpack.c.l.b16 %v268
    %v305 = vunpack.c.l.b16 %v269
    %v306 = vpack.c.b16 %v291, %v290
    %v307 = vpack.c.b16 %v293, %v292
    %v308 = vpack.c.b16 %v295, %v294
    %v309 = vpack.c.b16 %v297, %v296
    %v310 = vpack.c.b16 %v299, %v298
    %v311 = vpack.c.b16 %v301, %v300
    %v312 = vpack.c.b16 %v303, %v302
    %v313 = vpack.c.b16 %v305, %v304
    %322 = vmatpush.bf16.msra.mxu0 %v313
    %323 = vmatpush.bf16.msra.mxu0 %v312
    %324 = vmatpush.bf16.msra.mxu0 %v311
    %325 = vmatpush.bf16.msra.mxu0 %v310
    %326 = vmatpush.bf16.msra.mxu0 %v309
    %327 = vmatpush.bf16.msra.mxu0 %v308
    %328 = vmatpush.bf16.msra.mxu0 %v307
    %329 = vmatpush.bf16.msra.mxu0 %v306
    %330 = vmatmul.bf16.gmra.mxu0 %v253
    %v331 = vpop.f32.mrf.mxu0
    %v332 = vadd.f32 %v272, %v331
    %v333 = vpop.f32.mrf.mxu0
    %334 = vdwg.mxu0
    %v335 = vmax.f32 %v332, 0.0
    %v336 = vpack.c.bf16 %v335, %v335
    %v337 = vld [vmem:[#allocation10] sm:$0xf]
    %v338 = vld [vmem:[#allocation10 + $0x4] sm:$0xf]
    %v339 = vld [vmem:[#allocation10 + $0x8] sm:$0xf]
    %v340 = vld [vmem:[#allocation10 + $0xc] sm:$0xf]
    %v341 = vld [vmem:[#allocation10 + $0x10] sm:$0xf]
    %v342 = vld [vmem:[#allocation10 + $0x14] sm:$0xf]
    %v343 = vld [vmem:[#allocation10 + $0x18] sm:$0xf]
    %v344 = vld [vmem:[#allocation10 + $0x1c] sm:$0xf]
    %v345 = vld [vmem:[#allocation10 + $0x20] sm:$0xf]
    %v346 = vld [vmem:[#allocation10 + $0x24] sm:$0xf]
    %v347 = vld [vmem:[#allocation10 + $0x28] sm:$0xf]
    %v348 = vld [vmem:[#allocation10 + $0x2c] sm:$0xf]
    %v349 = vld [vmem:[#allocation10 + $0x30] sm:$0xf]
    %v350 = vld [vmem:[#allocation10 + $0x34] sm:$0xf]
    %v351 = vld [vmem:[#allocation10 + $0x38] sm:$0xf]
    %v352 = vld [vmem:[#allocation10 + $0x3c] sm:$0xf]
    %v353 = vld [vmem:[%s7] sm:$0x1]
    %v355 = vperm.slane %v353, 0
    %v373 = vunpack.c.l.b16 %v337
    %v374 = vunpack.c.l.b16 %v338
    %v375 = vunpack.c.l.b16 %v339
    %v376 = vunpack.c.l.b16 %v340
    %v377 = vunpack.c.l.b16 %v341
    %v378 = vunpack.c.l.b16 %v342
    %v379 = vunpack.c.l.b16 %v343
    %v380 = vunpack.c.l.b16 %v344
    %v381 = vunpack.c.l.b16 %v345
    %v382 = vunpack.c.l.b16 %v346
    %v383 = vunpack.c.l.b16 %v347
    %v384 = vunpack.c.l.b16 %v348
    %v385 = vunpack.c.l.b16 %v349
    %v386 = vunpack.c.l.b16 %v350
    %v387 = vunpack.c.l.b16 %v351
    %v388 = vunpack.c.l.b16 %v352
    %v389 = vpack.c.b16 %v374, %v373
    %v390 = vpack.c.b16 %v376, %v375
    %v391 = vpack.c.b16 %v378, %v377
    %v392 = vpack.c.b16 %v380, %v379
    %v393 = vpack.c.b16 %v382, %v381
    %v394 = vpack.c.b16 %v384, %v383
    %v395 = vpack.c.b16 %v386, %v385
    %v396 = vpack.c.b16 %v388, %v387
    %405 = vmatpush.bf16.msra.mxu0 %v396
    %406 = vmatpush.bf16.msra.mxu0 %v395
    %407 = vmatpush.bf16.msra.mxu0 %v394
    %408 = vmatpush.bf16.msra.mxu0 %v393
    %409 = vmatpush.bf16.msra.mxu0 %v392
    %410 = vmatpush.bf16.msra.mxu0 %v391
    %411 = vmatpush.bf16.msra.mxu0 %v390
    %412 = vmatpush.bf16.msra.mxu0 %v389
    %413 = vmatmul.bf16.gmra.mxu0 %v336
    %v414 = vpop.f32.mrf.mxu0
    %v415 = vadd.f32 %v355, %v414
    %v416 = vpop.f32.mrf.mxu0
    %417 = vdwg.mxu0
    %v418 = vmax.f32 %v415, 0.0
    %419 = vst [vmem:[#allocation12] sm:$0xff] %v418
    // Predicated region
    $region46: #{tpu_custom_call.1} parent=1 // pred_check
      _
    $region47: #{tpu_custom_call.1} parent=1 // pred_check_branch
      %421 = sbr.rel (0) target = $region49
    $region48: #{tpu_custom_call.1} parent=1 // pred_region
      %423 = vsyncadd [#allocation6], 0
      %s425 = sshll.u32 [#allocation12], 4
      %s426 = int_to_ptr.vmem [resolvable:$true] %s425
      %s427 = sshll.u32 %s8, 4
      %s428 = int_to_ptr.hbm [resolvable:$true] %s427
      %430 = dma.vmem_to_hbm [thread:$0]  %s426, 128, %s428, [#allocation6]
    $region49: #{tpu_custom_call.1} parent=1 // pred_fallthru
      _
    // Predicated region
    $region50: #{tpu_custom_call.1} parent=1 // pred_check
      _
    $region51: #{tpu_custom_call.1} parent=1 // pred_check_branch
      %432 = sbr.rel (0) target = $region53
    $region52: #{tpu_custom_call.1} parent=1 // pred_region
      %434 = dma.done [#allocation6], 128
    $region53: #{tpu_custom_call.1} parent=1 // pred_fallthru
      _
    %435 = vsyncpa [#allocation5], 1
    %436 = vsyncpa [#allocation8], 1
    %437 = vsyncpa [#allocation11], 1
    %438 = vsyncpa [#allocation6], 1

</llo_original>
